<compile_context>
chip_gen: v7x
topology: tpu7x:2x2x1
jax: 0.10.0
libtpu: 0.0.40
codegen_flags: <defaults>
</compile_context>

<pallas_src>
import functools

import jax
import jax.numpy as jnp
import numpy as np
from jax.experimental import pallas as pl
from jax.experimental.pallas import tpu as pltpu

EPS = 1e-6
SIGMA = 0.1                      # self.sigma in e_step
INV_SIGMA = 1.0 / SIGMA
D_RANGE = 10.0                   # clamp range for log-probs
DIST_COEF = -0.5 * INV_SIGMA * INV_SIGMA
HIGHEST = jax.lax.Precision.HIGHEST
BF16 = jnp.bfloat16
VMEM_LIMIT = 32 * 1024 * 1024    # safe on v5e/v6e (128 MiB) and v7x (64 MiB)
MAX_TN = 512                     # points per tile (lanes); amortizes step cost


def _choose_tn(n, cap=MAX_TN):
    """Largest tile <= cap that divides n and is a multiple of 128 lanes."""
    if n <= cap:
        return n
    t = (cap // 128) * 128
    while t >= 128:
        if n % t == 0:
            return t
        t -= 128
    # TODO(synk): ragged N with no 128-multiple divisor would need masked
    # tiles; fall back to one whole-cloud block per batch element.
    return n


# ----------------------------------------------------------------------------
# shared pointwise PointNet MLP, channels-first: f = relu(W3 relu(W2 relu(W1 p
# + b1) + b2) + b3).  BN in eval with default stats is identity and is folded
# away.  bf16 MXU operands, f32 accumulation; elementwise math stays f32.
# ----------------------------------------------------------------------------
def _mlp_cf(p, w1, b1, w2, b2, w3, b3):
    h = jnp.maximum(jnp.dot(w1, p.astype(BF16),
                            preferred_element_type=jnp.float32) + b1, 0.0)
    h = jnp.maximum(jnp.dot(w2, h.astype(BF16),
                            preferred_element_type=jnp.float32) + b2, 0.0)
    f = jnp.maximum(jnp.dot(w3, h.astype(BF16),
                            preferred_element_type=jnp.float32) + b3, 0.0)
    return f


def _weight_specs(h1, h2, k, hmax):
    return [
        pl.BlockSpec((h1, 3), lambda b, t: (0, 0)),       # w1t
        pl.BlockSpec((h2, h1), lambda b, t: (0, 0)),      # w2t
        pl.BlockSpec((k, h2), lambda b, t: (0, 0)),       # w3t
        pl.BlockSpec((hmax, 3), lambda b, t: (0, 0)),     # packed biases
    ]


def _unpack_biases(bias_ref, h1, h2, k):
    b1 = bias_ref[0:h1, 0:1]
    b2 = bias_ref[0:h2, 1:2]
    b3 = bias_ref[0:k, 2:3]
    return b1, b2, b3


# ----------------------------------------------------------------------------
# Kernel 1 (runs once): target features f0 = mlp(p0) reduced to their
# per-batch SUM (mean taken in the wrapper); tiled over the point axis.
# ----------------------------------------------------------------------------
def _feat_sum_kernel(p0_ref, w1_ref, w2_ref, w3_ref, bias_ref, out_ref):
    t = pl.program_id(1)

    @pl.when(t == 0)
    def _():
        out_ref[...] = jnp.zeros_like(out_ref)

    h1, h2, k = w1_ref.shape[0], w2_ref.shape[0], w3_ref.shape[0]
    b1, b2, b3 = _unpack_biases(bias_ref, h1, h2, k)
    f = _mlp_cf(p0_ref[0], w1_ref[...], b1, w2_ref[...], b2,
                w3_ref[...], b3)                           # (K, TN)
    out_ref[0] += jnp.sum(f, axis=1, keepdims=True)        # (K, 1)


def feat_mean(p0t, cf):
    """p0t: (B, 3, N) channels-first target cloud -> mean feature (B, K, 1)."""
    B, _, N = p0t.shape
    TN = _choose_tn(N)
    H1, H2, K = cf["w1t"].shape[0], cf["w2t"].shape[0], cf["w3t"].shape[0]
    HM = cf["bias"].shape[0]
    s = pl.pallas_call(
        _feat_sum_kernel,
        out_shape=jax.ShapeDtypeStruct((B, K, 1), jnp.float32),
        grid=(B, N // TN),
        in_specs=[pl.BlockSpec((1, 3, TN), lambda b, t: (b, 0, t))]
                 + _weight_specs(H1, H2, K, HM),
        out_specs=pl.BlockSpec((1, K, 1), lambda b, t: (b, 0, 0)),
        compiler_params=pltpu.CompilerParams(
            dimension_semantics=("parallel", "arbitrary"),
            vmem_limit_bytes=VMEM_LIMIT),
    )(p0t, cf["w1t"], cf["w2t"], cf["w3t"], cf["bias"])
    return s / float(N)


# ----------------------------------------------------------------------------
# Kernel 2 (runs once per EM iteration): fused
#   p = R @ p1 + t -> f = mlp(p) -> E-step responsibilities -> per-tile raw
#   M-step moments, accumulated into ONE packed lane-dense output block:
#     lanes 0-2 : (sum w p q^T)^T        lane 5 : sum w*p
#     lane 3    : sum p                  lane 6 : sum w*q
#     lane 4    : sum q (q = m1m0)       lane 7 : sum w
# p and f never leave VMEM.
# ----------------------------------------------------------------------------
def _fused_em_kernel(g_ref, p0_ref, p1_ref, mu_ref,
                     w1_ref, w2_ref, w3_ref, bias_ref, out_ref):
    t_id = pl.program_id(1)

    @pl.when(t_id == 0)
    def _():
        out_ref[...] = jnp.zeros_like(out_ref)

    Rt = g_ref[0]                                  # (3, 4) = [R | t]
    R = Rt[:, 0:3]
    t = Rt[:, 3:4]
    x = p1_ref[0]                                  # (3, TN) source points

    # rigid transform kept at f32 (tiny K=3 contraction)
    p = jnp.dot(R, x, precision=HIGHEST,
                preferred_element_type=jnp.float32) + t        # (3, TN)

    h1, h2, k = w1_ref.shape[0], w2_ref.shape[0], w3_ref.shape[0]
    b1, b2, b3 = _unpack_biases(bias_ref, h1, h2, k)
    f = _mlp_cf(p, w1_ref[...], b1, w2_ref[...], b2, w3_ref[...], b3)  # (K,TN)

    # ---- E-step: feature-space Gaussian responsibilities vs hoisted mu ----
    diff = f - mu_ref[0]                                           # (K, TN)
    dist = DIST_COEF * jnp.sum(diff * diff, axis=0, keepdims=True)  # (1, TN)
    m0 = jnp.exp(jnp.clip(dist, -D_RANGE, D_RANGE))                # (1, TN)

    # ---- M-step raw moments (combined into L / c_s / c_t in the wrapper) --
    p_tgt = p0_ref[0]                                              # (3, TN)
    ratio = m0 / (m0 + EPS)                                        # (1, TN)
    q = ratio * p_tgt                                              # m1m0
    w = ratio * (INV_SIGMA * INV_SIGMA)                            # (1, TN)
    wp = w * p                                                     # (3, TN)

    s_p = jnp.sum(p, axis=1, keepdims=True)                        # (3, 1)
    s_q = jnp.sum(q, axis=1, keepdims=True)
    s_wp = jnp.sum(wp, axis=1, keepdims=True)
    s_wq = jnp.sum(w * q, axis=1, keepdims=True)
    s_w = jnp.broadcast_to(jnp.sum(w, axis=1, keepdims=True), (3, 1))
    # (sum w p q^T)^T, computed off the MXU as lane reductions
    cols = [jnp.sum(wp[j:j + 1, :] * q, axis=1, keepdims=True) for j in range(3)]
    s_pq_t = jnp.concatenate(cols, axis=1)                         # (3, 3)

    packed = jnp.concatenate(
        [s_pq_t, s_p, s_q, s_wp, s_wq, s_w,
         jnp.zeros((3, 120), jnp.float32)], axis=1)                # (3, 128)
    out_ref[0] += packed


def fused_em_step(g34, p0t, p1t, mu, cf):
    """g34: (B,3,4); p0t/p1t: (B,3,N); mu: (B,K,1) -> packed moments (B,3,128)."""
    B, _, N = p0t.shape
    TN = _choose_tn(N)
    H1, H2, K = cf["w1t"].shape[0], cf["w2t"].shape[0], cf["w3t"].shape[0]
    HM = cf["bias"].shape[0]
    return pl.pallas_call(
        _fused_em_kernel,
        out_shape=jax.ShapeDtypeStruct((B, 3, 128), jnp.float32),
        grid=(B, N // TN),
        in_specs=[
            pl.BlockSpec((1, 3, 4), lambda b, t: (b, 0, 0)),
            pl.BlockSpec((1, 3, TN), lambda b, t: (b, 0, t)),
            pl.BlockSpec((1, 3, TN), lambda b, t: (b, 0, t)),
            pl.BlockSpec((1, K, 1), lambda b, t: (b, 0, 0)),
        ] + _weight_specs(H1, H2, K, HM),
        out_specs=pl.BlockSpec((1, 3, 128), lambda b, t: (b, 0, 0)),
        compiler_params=pltpu.CompilerParams(
            dimension_semantics=("parallel", "arbitrary"),
            vmem_limit_bytes=VMEM_LIMIT),
    )(g34, p0t, p1t, mu, cf["w1t"], cf["w2t"], cf["w3t"], cf["bias"])


def _finalize_moments(packed, n_points):
    """Combine packed raw moments into L (B,3,3), c_s (B,3), c_t (B,3)."""
    s_pq_t = packed[:, :, 0:3]
    s_p = packed[:, :, 3]
    s_q = packed[:, :, 4]
    s_wp = packed[:, :, 5]
    s_wq = packed[:, :, 6]
    s_w = packed[:, 0, 7]
    c_s = s_p / n_points
    c_t = s_q / n_points
    s_wpq = jnp.swapaxes(s_pq_t, -1, -2)
    L = (s_wpq
         - s_wp[:, :, None] * c_t[:, None, :]
         - c_s[:, :, None] * s_wq[:, None, :]
         + s_w[:, None, None] * c_s[:, :, None] * c_t[:, None, :])
    return L, c_s, c_t


# ----------------------------------------------------------------------------
# 3x3 polar rotation (replaces the batched jnp.linalg.svd of compute_kabsch):
# R = V @ U^T of L_safe's SVD == orthogonal polar factor of L_safe^T.
# ----------------------------------------------------------------------------
def _det3(A):
    return (A[..., 0, 0] * (A[..., 1, 1] * A[..., 2, 2] - A[..., 1, 2] * A[..., 2, 1])
            - A[..., 0, 1] * (A[..., 1, 0] * A[..., 2, 2] - A[..., 1, 2] * A[..., 2, 0])
            + A[..., 0, 2] * (A[..., 1, 0] * A[..., 2, 1] - A[..., 1, 1] * A[..., 2, 0]))


def _cofactor3(a):
    c00 = a[..., 1, 1] * a[..., 2, 2] - a[..., 1, 2] * a[..., 2, 1]
    c01 = -(a[..., 1, 0] * a[..., 2, 2] - a[..., 1, 2] * a[..., 2, 0])
    c02 = a[..., 1, 0] * a[..., 2, 1] - a[..., 1, 1] * a[..., 2, 0]
    c10 = -(a[..., 0, 1] * a[..., 2, 2] - a[..., 0, 2] * a[..., 2, 1])
    c11 = a[..., 0, 0] * a[..., 2, 2] - a[..., 0, 2] * a[..., 2, 0]
    c12 = -(a[..., 0, 0] * a[..., 2, 1] - a[..., 0, 1] * a[..., 2, 0])
    c20 = a[..., 0, 1] * a[..., 1, 2] - a[..., 0, 2] * a[..., 1, 1]
    c21 = -(a[..., 0, 0] * a[..., 1, 2] - a[..., 0, 2] * a[..., 1, 0])
    c22 = a[..., 0, 0] * a[..., 1, 1] - a[..., 0, 1] * a[..., 1, 0]
    r0 = jnp.stack([c00, c01, c02], axis=-1)
    r1 = jnp.stack([c10, c11, c12], axis=-1)
    r2 = jnp.stack([c20, c21, c22], axis=-1)
    return jnp.stack([r0, r1, r2], axis=-2)


def _polar_rotation(M, iters=12):
    """Orthogonal polar factor of batched 3x3 M via det-scaled Newton."""
    # TODO(synk): assumes nonsingular M (matches the reference SVD result);
    # a rank-deficient L_safe would need an exact SVD fallback.
    norm = jnp.sqrt(jnp.sum(M * M, axis=(-2, -1), keepdims=True)) + 1e-30
    X0 = M / norm

    def body(X, _):
        det = _det3(X)
        det = jnp.where(jnp.abs(det) < 1e-20,
                        jnp.where(det < 0, -1e-20, 1e-20), det)
        inv_t = _cofactor3(X) / det[..., None, None]
        zeta = jnp.abs(det) ** (-1.0 / 3.0)
        X = 0.5 * (zeta[..., None, None] * X + inv_t / zeta[..., None, None])
        return X, None

    X, _ = jax.lax.scan(body, X0, None, length=iters)
    return X


# ----------------------------------------------------------------------------
# PointEM forward (do_em loop): returns (r, g, g_series, itr)
# (In the PyTorch reference, r stays None and the estimate lives in self.g.)
# ----------------------------------------------------------------------------
@functools.partial(jax.jit, static_argnames="maxiter")
def _em_loop(p0t, p1t, cf, maxiter):
    B, _, N = p0t.shape
    g0 = jnp.broadcast_to(jnp.eye(4, dtype=jnp.float32), (B, 4, 4))
    # mu depends only on f0 = ptnet(p0): hoisted out of the EM loop.
    mu = feat_mean(p0t, cf)                                    # (B, K, 1)
    eye3 = jnp.eye(3, dtype=jnp.float32)

    def step(g, _):
        packed = fused_em_step(g[:, 0:3, :], p0t, p1t, mu, cf)
        L, c_s, c_t = _finalize_moments(packed, N)

        # compute_kabsch tail; L.mean() is a GLOBAL scalar mean (torch semantics)
        L_safe = L + 1e-4 * jnp.mean(L) * eye3
        R = _polar_rotation(jnp.swapaxes(L_safe, -1, -2))      # = V @ U^T
        t = c_t - jnp.einsum("bij,bj->bi", R, c_s)

        # update_transformation_matrix
        g_new = g.at[:, 0:3, 0:3].set(jnp.matmul(R, g[:, 0:3, 0:3]))
        g_new = g_new.at[:, 0:3, 3].set(
            jnp.einsum("bij,bj->bi", R, g[:, 0:3, 3]) + t)
        return g_new, g_new

    g_fin, g_hist = jax.lax.scan(step, g0, xs=None, length=maxiter)
    g_series = jnp.concatenate([g0[None], g_hist], axis=0)
    return g_fin, g_series


def point_em_forward(p0, p1, params, maxiter=10):
    cf = prep_params_cf(params)
    p0t = jnp.swapaxes(p0, 1, 2)
    p1t = jnp.swapaxes(p1, 1, 2)
    g, g_series = _em_loop(p0t, p1t, cf, maxiter=maxiter)
    r = None  # do_em never assigns r inside the loop; forward() returns None
    return r, g, g_series, maxiter


# ----------------------------------------------------------------------------
# Pure-JAX references (same bf16-operand / f32-accumulate arithmetic) used to
# verify the Pallas kernels.
# ----------------------------------------------------------------------------
def ref_mlp(p, params):
    h = jax.nn.relu(jnp.einsum("bni,ij->bnj", p.astype(BF16),
                               params["w1"].astype(BF16),
                               preferred_element_type=jnp.float32)
                    + params["b1"])
    h = jax.nn.relu(jnp.einsum("bni,ij->bnj", h.astype(BF16),
                               params["w2"].astype(BF16),
                               preferred_element_type=jnp.float32)
                    + params["b2"])
    return jax.nn.relu(jnp.einsum("bni,ij->bnj", h.astype(BF16),
                                  params["w3"].astype(BF16),
                                  preferred_element_type=jnp.float32)
                       + params["b3"])


def ref_feat_mean(p0, params):
    return jnp.mean(ref_mlp(p0, params), axis=1, keepdims=True)   # (B, 1, K)


def ref_em_iteration(g, p0, p1, mu0, params):
    R = g[:, 0:3, 0:3]
    t = g[:, 0:3, 3]
    p = jnp.einsum("bij,bnj->bni", R, p1, precision=HIGHEST) + t[:, None, :]
    f = ref_mlp(p, params)
    diff = f - mu0
    dist = DIST_COEF * jnp.sum(diff * diff, axis=2, keepdims=True)
    m0 = jnp.exp(jnp.clip(dist, -D_RANGE, D_RANGE))
    m1m0 = (m0 * p0) / (m0 + EPS)
    w = (m0 / (m0 + EPS)) * (INV_SIGMA * INV_SIGMA)
    c_s = jnp.mean(p, axis=1)
    c_t = jnp.mean(m1m0, axis=1)
    P = p - c_s[:, None, :]
    Q = m1m0 - c_t[:, None, :]
    L = jnp.einsum("bni,bnj->bij", P * w, Q, precision=HIGHEST)
    return L, c_s, c_t


# ----------------------------------------------------------------------------
# parameter setup
# ----------------------------------------------------------------------------
def make_params(key, h1=64, h2=64, k=32):
    ks = jax.random.split(key, 6)
    return {
        "w1": jax.random.normal(ks[0], (3, h1), jnp.float32) * 0.5,
        "b1": jax.random.normal(ks[1], (1, h1), jnp.float32) * 0.1,
        "w2": jax.random.normal(ks[2], (h1, h2), jnp.float32) * 0.1,
        "b2": jax.random.normal(ks[3], (1, h2), jnp.float32) * 0.1,
        "w3": jax.random.normal(ks[4], (h2, k), jnp.float32) * 0.1,
        "b3": jax.random.normal(ks[5], (1, k), jnp.float32) * 0.1,
    }


def prep_params_cf(params):
    """Channels-first, bf16 MXU weights; biases packed into one f32 array."""
    w1t = params["w1"].T.astype(BF16)          # (H1, 3)
    w2t = params["w2"].T.astype(BF16)          # (H2, H1)
    w3t = params["w3"].T.astype(BF16)          # (K, H2)
    h1, h2, k = w1t.shape[0], w2t.shape[0], w3t.shape[0]
    hmax = max(h1, h2, k)
    bias = jnp.zeros((hmax, 3), jnp.float32)
    bias = bias.at[:h1, 0].set(params["b1"][0])
    bias = bias.at[:h2, 1].set(params["b2"][0])
    bias = bias.at[:k, 2].set(params["b3"][0])
    return {"w1t": w1t, "w2t": w2t, "w3t": w3t, "bias": bias}


# ----------------------------------------------------------------------------
# main
# ----------------------------------------------------------------------------
if __name__ == "__main__":
    key = jax.random.PRNGKey(0)
    k_pts, k_par = jax.random.split(key)

    B, N = 2, 1024                              # N chosen to exercise N-tiling
    params = make_params(k_par, h1=64, h2=64, k=32)
    cf = prep_params_cf(params)

    # target cloud p0, source cloud p1 = small rigid motion of p0
    p0 = jax.random.normal(k_pts, (B, N, 3), jnp.float32)
    ang = 0.05
    Rz = jnp.array([[np.cos(ang), -np.sin(ang), 0.0],
                    [np.sin(ang), np.cos(ang), 0.0],
                    [0.0, 0.0, 1.0]], dtype=jnp.float32)
    p1 = jnp.einsum("ij,bnj->bni", Rz, p0) + jnp.array([0.02, -0.01, 0.03],
                                                       dtype=jnp.float32)
    p0t = jnp.swapaxes(p0, 1, 2)                # (B, 3, N) channels-first
    p1t = jnp.swapaxes(p1, 1, 2)

    # ---- verify kernel 1 (target feature mean) ----
    mu0_pl = jax.block_until_ready(feat_mean(p0t, cf))            # (B, K, 1)
    mu0_rf = jnp.swapaxes(ref_feat_mean(p0, params), 1, 2)
    np.testing.assert_allclose(np.asarray(mu0_pl), np.asarray(mu0_rf),
                               rtol=2e-3, atol=2e-3)
    mu0_cl = jnp.swapaxes(mu0_pl, 1, 2)                           # (B, 1, K)

    # ---- verify kernel 2 (fused transform + MLP + E/M-step moments) ----
    g_id = jnp.broadcast_to(jnp.eye(4, dtype=jnp.float32), (B, 4, 4))
    g_test = g_id.at[:, 0:3, 0:3].set(Rz)
    g_test = g_test.at[:, 0:3, 3].set(
        jnp.array([0.05, -0.02, 0.01], dtype=jnp.float32))
    for g_chk in (g_id, g_test):
        packed = jax.block_until_ready(
            fused_em_step(g_chk[:, 0:3, :], p0t, p1t, mu0_pl, cf))
        L_pl, cs_pl, ct_pl = _finalize_moments(packed, N)
        L_rf, cs_rf, ct_rf = ref_em_iteration(g_chk, p0, p1, mu0_cl, params)
        np.testing.assert_allclose(np.asarray(L_pl), np.asarray(L_rf),
                                   rtol=1e-2, atol=1e-2)
        np.testing.assert_allclose(np.asarray(cs_pl), np.asarray(cs_rf),
                                   rtol=2e-3, atol=2e-3)
        np.testing.assert_allclose(np.asarray(ct_pl), np.asarray(ct_rf),
                                   rtol=2e-3, atol=2e-3)

    # ---- verify the SVD replacement once (polar Newton vs jnp SVD) ----
    packed0 = fused_em_step(g_id[:, 0:3, :], p0t, p1t, mu0_pl, cf)
    L0, _, _ = _finalize_moments(packed0, N)
    L0_safe = L0 + 1e-4 * jnp.mean(L0) * jnp.eye(3, dtype=jnp.float32)
    R_polar = _polar_rotation(jnp.swapaxes(L0_safe, -1, -2))
    U0, _, Vh0 = jnp.linalg.svd(L0_safe)
    R_svd = jnp.matmul(jnp.swapaxes(Vh0, -1, -2), jnp.swapaxes(U0, -1, -2))
    np.testing.assert_allclose(np.asarray(R_polar), np.asarray(R_svd),
                               rtol=0.0, atol=1e-3)

    # ---- run the full (jitted) PointEM forward EM loop ----
    maxiter = 3
    r, g, g_series, itr = point_em_forward(p0, p1, params, maxiter=maxiter)
    g = jax.block_until_ready(g)
    g_series = jax.block_until_ready(g_series)

    assert g.shape == (B, 4, 4)
    assert g_series.shape == (maxiter + 1, B, 4, 4)
    assert bool(jnp.all(jnp.isfinite(g)))
    assert bool(jnp.all(jnp.isfinite(g_series)))
    # bottom row of each transform must stay [0, 0, 0, 1]
    np.testing.assert_allclose(np.asarray(g[:, 3, :]),
                               np.tile(np.array([0.0, 0.0, 0.0, 1.0],
                                                dtype=np.float32), (B, 1)),
                               atol=1e-6)

    print("KERNEL_OK")
</pallas_src>

<mosaic_0001>
module attributes {stable_mosaic.version = 11 : i64} {
  func.func @_feat_sum_kernel(%arg0: i32, %arg1: i32, %arg2: memref<1x3x512xf32, #tpu.memory_space<vmem>>, %arg3: memref<64x3xbf16, #tpu.memory_space<vmem>>, %arg4: memref<64x64xbf16, #tpu.memory_space<vmem>>, %arg5: memref<32x64xbf16, #tpu.memory_space<vmem>>, %arg6: memref<64x3xf32, #tpu.memory_space<vmem>>, %arg7: memref<1x32x1xf32, #tpu.memory_space<vmem>>) attributes {dimension_semantics = [#tpu.dimension_semantics<parallel>, #tpu.dimension_semantics<arbitrary>], iteration_bounds = array<i64: 2, 2>, scalar_prefetch = 0 : i64, scratch_operands = 0 : i64, tpu.core_type = #tpu.core_type<tc>, window_params = [{transform_indices = @transform_0, window_bounds = array<i64: 1, 3, 512>}, {pipeline_mode = #tpu.pipeline_mode<synchronous>, transform_indices = @transform_1, window_bounds = array<i64: 64, 3>}, {pipeline_mode = #tpu.pipeline_mode<synchronous>, transform_indices = @transform_2, window_bounds = array<i64: 64, 64>}, {pipeline_mode = #tpu.pipeline_mode<synchronous>, transform_indices = @transform_3, window_bounds = array<i64: 32, 64>}, {pipeline_mode = #tpu.pipeline_mode<synchronous>, transform_indices = @transform_4, window_bounds = array<i64: 64, 3>}, {transform_indices = @transform_5, window_bounds = array<i64: 1, 32, 1>}]} {
    %c0_i32 = arith.constant 0 : i32
    %0 = arith.cmpi eq, %arg1, %c0_i32 : i32
    %1 = arith.extui %0 : i1 to i32
    %c0_i32_0 = arith.constant 0 : i32
    %2 = arith.cmpi ne, %1, %c0_i32_0 : i32
    scf.if %2 {
      %cst_25 = arith.constant 0.000000e+00 : f32
      %37 = vector.broadcast %cst_25 : f32 to vector<1x32x1xf32>
      %c0_26 = arith.constant 0 : index
      %c0_27 = arith.constant 0 : index
      %c0_28 = arith.constant 0 : index
      %38 = vector.load %arg7[%c0_26, %c0_27, %c0_28] : memref<1x32x1xf32, #tpu.memory_space<vmem>>, vector<1x32x1xf32>
      tpu.vector_store %arg7[%c0_26, %c0_27, %c0_28], %37 {strides = array<i32>} : memref<1x32x1xf32, #tpu.memory_space<vmem>>, vector<1x32x1xf32>,
    } else {
    }
    %c0 = arith.constant 0 : index
    %c0_1 = arith.constant 0 : index
    %3 = vector.load %arg6[%c0, %c0_1] : memref<64x3xf32, #tpu.memory_space<vmem>>, vector<64x1xf32>
    %c0_2 = arith.constant 0 : index
    %c1 = arith.constant 1 : index
    %4 = vector.load %arg6[%c0_2, %c1] : memref<64x3xf32, #tpu.memory_space<vmem>>, vector<64x1xf32>
    %c0_3 = arith.constant 0 : index
    %c2 = arith.constant 2 : index
    %5 = vector.load %arg6[%c0_3, %c2] : memref<64x3xf32, #tpu.memory_space<vmem>>, vector<32x1xf32>
    %c0_4 = arith.constant 0 : index
    %c0_5 = arith.constant 0 : index
    %c0_6 = arith.constant 0 : index
    %6 = vector.load %arg2[%c0_4, %c0_5, %c0_6] : memref<1x3x512xf32, #tpu.memory_space<vmem>>, vector<1x3x512xf32>
    %7 = vector.shape_cast %6 : vector<1x3x512xf32> to vector<3x512xf32>
    %c0_7 = arith.constant 0 : index
    %c0_8 = arith.constant 0 : index
    %8 = vector.load %arg3[%c0_7, %c0_8] : memref<64x3xbf16, #tpu.memory_space<vmem>>, vector<64x3xbf16>
    %c0_9 = arith.constant 0 : index
    %c0_10 = arith.constant 0 : index
    %9 = vector.load %arg4[%c0_9, %c0_10] : memref<64x64xbf16, #tpu.memory_space<vmem>>, vector<64x64xbf16>
    %c0_11 = arith.constant 0 : index
    %c0_12 = arith.constant 0 : index
    %10 = vector.load %arg5[%c0_11, %c0_12] : memref<32x64xbf16, #tpu.memory_space<vmem>>, vector<32x64xbf16>
    %11 = arith.truncf %7 : vector<3x512xf32> to vector<3x512xbf16>
    %cst = arith.constant dense<0.000000e+00> : vector<64x512xf32>
    %12 = tpu.matmul %8, %11, %cst {dimension_numbers = #tpu.dot_dimension_numbers<[1], [0], [0], [1], [0, 0, 1, 1], [], []>} : vector<64x3xbf16>, vector<3x512xbf16>, vector<64x512xf32> -> vector<64x512xf32>
    %13 = vector.broadcast %3 : vector<64x1xf32> to vector<64x512xf32>
    %14 = arith.addf %12, %13 : vector<64x512xf32>
    %cst_13 = arith.constant 0.000000e+00 : f32
    %15 = vector.broadcast %cst_13 : f32 to vector<64x512xf32>
    %16 = arith.maximumf %14, %15 : vector<64x512xf32>
    %17 = arith.truncf %16 : vector<64x512xf32> to vector<64x512xbf16>
    %cst_14 = arith.constant dense<0.000000e+00> : vector<64x512xf32>
    %18 = tpu.matmul %9, %17, %cst_14 {dimension_numbers = #tpu.dot_dimension_numbers<[1], [0], [0], [1], [0, 0, 1, 1], [], []>} : vector<64x64xbf16>, vector<64x512xbf16>, vector<64x512xf32> -> vector<64x512xf32>
    %19 = vector.broadcast %4 : vector<64x1xf32> to vector<64x512xf32>
    %20 = arith.addf %18, %19 : vector<64x512xf32>
    %cst_15 = arith.constant 0.000000e+00 : f32
    %21 = vector.broadcast %cst_15 : f32 to vector<64x512xf32>
    %22 = arith.maximumf %20, %21 : vector<64x512xf32>
    %23 = arith.truncf %22 : vector<64x512xf32> to vector<64x512xbf16>
    %cst_16 = arith.constant dense<0.000000e+00> : vector<32x512xf32>
    %24 = tpu.matmul %10, %23, %cst_16 {dimension_numbers = #tpu.dot_dimension_numbers<[1], [0], [0], [1], [0, 0, 1, 1], [], []>} : vector<32x64xbf16>, vector<64x512xbf16>, vector<32x512xf32> -> vector<32x512xf32>
    %25 = vector.broadcast %5 : vector<32x1xf32> to vector<32x512xf32>
    %26 = arith.addf %24, %25 : vector<32x512xf32>
    %cst_17 = arith.constant 0.000000e+00 : f32
    %27 = vector.broadcast %cst_17 : f32 to vector<32x512xf32>
    %28 = arith.maximumf %26, %27 : vector<32x512xf32>
    %c0_18 = arith.constant 0 : index
    %c0_19 = arith.constant 0 : index
    %c0_20 = arith.constant 0 : index
    %29 = vector.load %arg7[%c0_18, %c0_19, %c0_20] : memref<1x32x1xf32, #tpu.memory_space<vmem>>, vector<1x32x1xf32>
    %30 = vector.shape_cast %29 : vector<1x32x1xf32> to vector<32x1xf32>
    %cst_21 = arith.constant dense<0.000000e+00> : vector<32xf32>
    %31 = vector.multi_reduction <add>, %28, %cst_21 [1] : vector<32x512xf32> to vector<32xf32>
    %32 = vector.shape_cast %31 : vector<32xf32> to vector<32x1xf32>
    %33 = arith.addf %30, %32 : vector<32x1xf32>
    %c0_22 = arith.constant 0 : index
    %c0_23 = arith.constant 0 : index
    %c0_24 = arith.constant 0 : index
    %34 = vector.load %arg7[%c0_22, %c0_23, %c0_24] : memref<1x32x1xf32, #tpu.memory_space<vmem>>, vector<1x32x1xf32>
    %35 = vector.shape_cast %34 : vector<1x32x1xf32> to vector<32x1xf32>
    %36 = vector.shape_cast %33 : vector<32x1xf32> to vector<1x32x1xf32>
    tpu.vector_store %arg7[%c0_22, %c0_23, %c0_24], %36 {strides = array<i32>} : memref<1x32x1xf32, #tpu.memory_space<vmem>>, vector<1x32x1xf32>,
    return
  }
  func.func @transform_0(%arg0: i32, %arg1: i32) -> (i32, i32, i32) {
    %c0_i32 = arith.constant 0 : i32
    %c0_i32_0 = arith.constant 0 : i32
    return %arg0, %c0_i32, %arg1 : i32, i32, i32
  }
  func.func @transform_1(%arg0: i32, %arg1: i32) -> (i32, i32) {
    %c0_i32 = arith.constant 0 : i32
    %c0_i32_0 = arith.constant 0 : i32
    %c0_i32_1 = arith.constant 0 : i32
    return %c0_i32, %c0_i32_0 : i32, i32
  }
  func.func @transform_2(%arg0: i32, %arg1: i32) -> (i32, i32) {
    %c0_i32 = arith.constant 0 : i32
    %c0_i32_0 = arith.constant 0 : i32
    %c0_i32_1 = arith.constant 0 : i32
    return %c0_i32, %c0_i32_0 : i32, i32
  }
  func.func @transform_3(%arg0: i32, %arg1: i32) -> (i32, i32) {
    %c0_i32 = arith.constant 0 : i32
    %c0_i32_0 = arith.constant 0 : i32
    %c0_i32_1 = arith.constant 0 : i32
    return %c0_i32, %c0_i32_0 : i32, i32
  }
  func.func @transform_4(%arg0: i32, %arg1: i32) -> (i32, i32) {
    %c0_i32 = arith.constant 0 : i32
    %c0_i32_0 = arith.constant 0 : i32
    %c0_i32_1 = arith.constant 0 : i32
    return %c0_i32, %c0_i32_0 : i32, i32
  }
  func.func @transform_5(%arg0: i32, %arg1: i32) -> (i32, i32, i32) {
    %c0_i32 = arith.constant 0 : i32
    %c0_i32_0 = arith.constant 0 : i32
    %c0_i32_1 = arith.constant 0 : i32
    return %arg0, %c0_i32, %c0_i32_0 : i32, i32, i32
  }
}

</mosaic_0001>

<llo_original>
// kernel: tpu_custom_call.1
$region0: #{tpu_custom_call.1}
  #allocation0 [shape = 'u32[]', space=smem, size = 0x4, offset = 0x4, fixed_abs, tag = 'smem constant byte address 0x4 - core index']
  #allocation1 [shape = 'u32[144,128]{1,0:T(1,128)}', space=vmem, size = 0x12000, scoped, tag = 'internal scratch']
  %s0 = inlined_call_operand.vmem [shape: f32[2,3,1024], index: 0, kind: input, shape index: {}]
  %s1 = inlined_call_operand.vmem [shape: bf16[64,3], index: 1, kind: input, shape index: {}]
  %s2 = inlined_call_operand.vmem [shape: bf16[64,64], index: 2, kind: input, shape index: {}]
  %s3 = inlined_call_operand.vmem [shape: bf16[32,64], index: 3, kind: input, shape index: {}]
  %s4 = inlined_call_operand.vmem [shape: f32[64,3], index: 4, kind: input, shape index: {}]
  %s5 = inlined_call_operand.vmem [shape: f32[2,32,1], index: 5, kind: output, shape index: {}]
  %s6 = sld [smem:[#allocation0]]
  $region57: #{tpu_custom_call.1} parent=0
    _
  %s8 = ssub.s32 1, %s6
  %s9 = scalar_select 0, %s8, %s6
  loop: start=0, step=1, limit=6
  $region2: #{tpu_custom_call.1} parent=0 // loop_pre_header
    _
  $region3: #{tpu_custom_call.1} parent=0 // loop_header
    %s11 = sphi 0, %s15
    %p12 = scmp.ge.s32.totalorder %s11, 6
    %s18 = sphi 0, %s30
    %s19 = sphi 0, %s26
    %s20 = sphi 0, %s18
    %s21 = sphi 0, %s19
    %s22 = sphi 0, %s20
    %s23 = sphi 0, %s21
    %s35 = sphi 0, %s37
    %s38 = sphi 0, %s35
    %s39 = sphi 0, %s38
    %s55 = sphi 0, %s39
    %s59 = sphi 0, %s59
    %s61 = sphi 0, %s59
    %s62 = sphi 0, %s61
    %s76 = sphi 0, %s62
    %s80 = sphi 0, %s80
    %s82 = sphi 0, %s80
    %s83 = sphi 0, %s82
    %s97 = sphi 0, %s83
    %s101 = sphi 0, %s101
    %s103 = sphi 0, %s101
    %s104 = sphi 0, %s103
    %s118 = sphi 0, %s104
    %s122 = sphi 0, %s122
    %s124 = sphi 0, %s122
    %s125 = sphi 0, %s124
    %s139 = sphi 0, %s125
    %s145 = sphi 0, %s147
    %s148 = sphi 0, %s145
    %s149 = sphi 0, %s148
    %s165 = sphi 0, %s149
  $region4: #{tpu_custom_call.1} parent=0 // loop_header_branch
    %14 = sbr.rel (%p12) target = $region8
  $region5: #{tpu_custom_call.1} parent=0 // loop_body
    %s16 = ssub.s32 %s11, 1
    %s17 = ssub.s32 %s11, 2
    %s24 = sadd.s32 1, %s19
    %p25 = scmp.ge.s32.totalorder %s24, 2
    %s26 = scalar_select %p25, 0, %s24
    %s27 = sadd.s32 1, %s18
    %s28 = scalar_select %p25, %s27, %s18
    %p29 = scmp.ge.s32.totalorder %s28, 2
    %s30 = scalar_select %p29, 0, %s28
    %s31 = ssub.s32 %s18, %s30
    %s32 = ssub.s32 %s19, %s26
    %s33 = sor.u32 %s31, %s32
    %p34 = scmp.eq.s32.totalorder %s33, 0
    %s36 = sadd.s32 %s35, 1
    %s37 = scalar_select %p34, %s35, %s36
    %p40 = pneg %p34
    %p41 = scmp.eq.s32.totalorder %s11, 3
    %p42 = por %p40, %p41
    %p43 = scmp.ne.s32.totalorder %s35, %s38
    %p44 = scmp.eq.s32.totalorder %s11, 0
    %p45 = por %p43, %p44
    %p46 = scmp.ne.s32.totalorder %s35, %s38
    %p47 = scmp.eq.s32.totalorder %s16, 3
    %p48 = por %p46, %p47
    %p49 = scmp.ne.s32.totalorder %s38, %s39
    %p50 = scmp.eq.s32.totalorder %s16, 0
    %p51 = por %p49, %p50
    %p52 = scmp.ne.s32.totalorder %s38, %s39
    %p53 = scmp.eq.s32.totalorder %s17, 3
    %p54 = por %p52, %p53
    %p56 = scmp.ne.s32.totalorder %s39, %s55
    %p57 = scmp.eq.s32.totalorder %s17, 0
    %p58 = por %p56, %p57
    %s60 = sadd.s32 %s59, 1
    %p63 = scmp.eq.s32.totalorder %s11, 3
    %p64 = scmp.ne.s32.totalorder %s59, %s61
    %p65 = scmp.eq.s32.totalorder %s11, 0
    %p66 = por %p64, %p65
    %p67 = scmp.ne.s32.totalorder %s59, %s61
    %p68 = scmp.eq.s32.totalorder %s16, 3
    %p69 = por %p67, %p68
    %p70 = scmp.ne.s32.totalorder %s61, %s62
    %p71 = scmp.eq.s32.totalorder %s16, 0
    %p72 = por %p70, %p71
    %p73 = scmp.ne.s32.totalorder %s61, %s62
    %p74 = scmp.eq.s32.totalorder %s17, 3
    %p75 = por %p73, %p74
    %p77 = scmp.ne.s32.totalorder %s62, %s76
    %p78 = scmp.eq.s32.totalorder %s17, 0
    %p79 = por %p77, %p78
    %s81 = sadd.s32 %s80, 1
    %p84 = scmp.eq.s32.totalorder %s11, 3
    %p85 = scmp.ne.s32.totalorder %s80, %s82
    %p86 = scmp.eq.s32.totalorder %s11, 0
    %p87 = por %p85, %p86
    %p88 = scmp.ne.s32.totalorder %s80, %s82
    %p89 = scmp.eq.s32.totalorder %s16, 3
    %p90 = por %p88, %p89
    %p91 = scmp.ne.s32.totalorder %s82, %s83
    %p92 = scmp.eq.s32.totalorder %s16, 0
    %p93 = por %p91, %p92
    %p94 = scmp.ne.s32.totalorder %s82, %s83
    %p95 = scmp.eq.s32.totalorder %s17, 3
    %p96 = por %p94, %p95
    %p98 = scmp.ne.s32.totalorder %s83, %s97
    %p99 = scmp.eq.s32.totalorder %s17, 0
    %p100 = por %p98, %p99
    %s102 = sadd.s32 %s101, 1
    %p105 = scmp.eq.s32.totalorder %s11, 3
    %p106 = scmp.ne.s32.totalorder %s101, %s103
    %p107 = scmp.eq.s32.totalorder %s11, 0
    %p108 = por %p106, %p107
    %p109 = scmp.ne.s32.totalorder %s101, %s103
    %p110 = scmp.eq.s32.totalorder %s16, 3
    %p111 = por %p109, %p110
    %p112 = scmp.ne.s32.totalorder %s103, %s104
    %p113 = scmp.eq.s32.totalorder %s16, 0
    %p114 = por %p112, %p113
    %p115 = scmp.ne.s32.totalorder %s103, %s104
    %p116 = scmp.eq.s32.totalorder %s17, 3
    %p117 = por %p115, %p116
    %p119 = scmp.ne.s32.totalorder %s104, %s118
    %p120 = scmp.eq.s32.totalorder %s17, 0
    %p121 = por %p119, %p120
    %s123 = sadd.s32 %s122, 1
    %p126 = scmp.eq.s32.totalorder %s11, 3
    %p127 = scmp.ne.s32.totalorder %s122, %s124
    %p128 = scmp.eq.s32.totalorder %s11, 0
    %p129 = por %p127, %p128
    %p130 = scmp.ne.s32.totalorder %s122, %s124
    %p131 = scmp.eq.s32.totalorder %s16, 3
    %p132 = por %p130, %p131
    %p133 = scmp.ne.s32.totalorder %s124, %s125
    %p134 = scmp.eq.s32.totalorder %s16, 0
    %p135 = por %p133, %p134
    %p136 = scmp.ne.s32.totalorder %s124, %s125
    %p137 = scmp.eq.s32.totalorder %s17, 3
    %p138 = por %p136, %p137
    %p140 = scmp.ne.s32.totalorder %s125, %s139
    %p141 = scmp.eq.s32.totalorder %s17, 0
    %p142 = por %p140, %p141
    %s143 = ssub.s32 %s18, %s30
    %p144 = scmp.eq.s32.totalorder %s143, 0
    %s146 = sadd.s32 %s145, 1
    %s147 = scalar_select %p144, %s145, %s146
    %p150 = pneg %p144
    %p151 = scmp.eq.s32.totalorder %s11, 3
    %p152 = por %p150, %p151
    %p153 = scmp.ne.s32.totalorder %s145, %s148
    %p154 = scmp.eq.s32.totalorder %s11, 0
    %p155 = por %p153, %p154
    %p156 = scmp.ne.s32.totalorder %s145, %s148
    %p157 = scmp.eq.s32.totalorder %s16, 3
    %p158 = por %p156, %p157
    %p159 = scmp.ne.s32.totalorder %s148, %s149
    %p160 = scmp.eq.s32.totalorder %s16, 0
    %p161 = por %p159, %p160
    %p162 = scmp.ne.s32.totalorder %s148, %s149
    %p163 = scmp.eq.s32.totalorder %s17, 3
    %p164 = por %p162, %p163
    %p166 = scmp.ne.s32.totalorder %s149, %s165
    %p167 = scmp.eq.s32.totalorder %s17, 0
    %p168 = por %p166, %p167
    %p169 = scmp.le.s32.totalorder 1, %s11
    %p170 = scmp.lt.s32.totalorder %s11, 5
    %p171 = pnand %p169, %p170
    %p172 = pneg %p171
    // Predicated region
    $region9: #{tpu_custom_call.1} parent=5 // pred_check
      _
    $region10: #{tpu_custom_call.1} parent=5 // pred_check_branch
      %174 = sbr.rel (%p171) target = $region12
    $region11: #{tpu_custom_call.1} parent=5 // pred_region
      %s175 = ssub.s32 %s11, 1
      // Predicated region
      $region13: #{tpu_custom_call.1} parent=11 // pred_check
        %p176 = pneg %p72
      $region14: #{tpu_custom_call.1} parent=11 // pred_check_branch
        %178 = sbr.rel (%p176) target = $region16
      $region15: #{tpu_custom_call.1} parent=11 // pred_region
        _
      $region16: #{tpu_custom_call.1} parent=11 // pred_fallthru
        _
      // Predicated region
      $region17: #{tpu_custom_call.1} parent=11 // pred_check
        %p179 = pneg %p93
      $region18: #{tpu_custom_call.1} parent=11 // pred_check_branch
        %181 = sbr.rel (%p179) target = $region20
      $region19: #{tpu_custom_call.1} parent=11 // pred_region
        _
      $region20: #{tpu_custom_call.1} parent=11 // pred_fallthru
        _
      // Predicated region
      $region21: #{tpu_custom_call.1} parent=11 // pred_check
        %p182 = pneg %p114
      $region22: #{tpu_custom_call.1} parent=11 // pred_check_branch
        %184 = sbr.rel (%p182) target = $region24
      $region23: #{tpu_custom_call.1} parent=11 // pred_region
        _
      $region24: #{tpu_custom_call.1} parent=11 // pred_fallthru
        _
      // Predicated region
      $region25: #{tpu_custom_call.1} parent=11 // pred_check
        %p185 = pneg %p135
      $region26: #{tpu_custom_call.1} parent=11 // pred_check_branch
        %187 = sbr.rel (%p185) target = $region28
      $region27: #{tpu_custom_call.1} parent=11 // pred_region
        _
      $region28: #{tpu_custom_call.1} parent=11 // pred_fallthru
        _
    $region12: #{tpu_custom_call.1} parent=5 // pred_fallthru
      _
    %p188 = scmp.lt.s32.totalorder %s11, 4
    // Predicated region
    $region29: #{tpu_custom_call.1} parent=5 // pred_check
      %p189 = pneg %p188
    $region30: #{tpu_custom_call.1} parent=5 // pred_check_branch
      %191 = sbr.rel (%p189) target = $region32
    $region31: #{tpu_custom_call.1} parent=5 // pred_region
      // Predicated region
      $region33: #{tpu_custom_call.1} parent=31 // pred_check
        %p192 = pneg %p45
      $region34: #{tpu_custom_call.1} parent=31 // pred_check_branch
        %194 = sbr.rel (%p192) target = $region36
      $region35: #{tpu_custom_call.1} parent=31 // pred_region
        %s195 = smul.u32 4, %s19
        %p196 = scmp.lt.s32.totalorder %s18, 1
        %s197 = scalar_select %p196, %s18, 1
        %p198 = scmp.lt.s32.totalorder %s195, 7
        %s199 = scalar_select %p198, %s195, 7
        %s200 = smul.addr %s197, 8
        %s201 = sadd.s32 %s199, %s200
        %s202 = smul.addr %s201, 4
        %s203 = scalar_lea.vmem %s0, %s202
        %s204 = smul.u32 4, %s19
      $region36: #{tpu_custom_call.1} parent=31 // pred_fallthru
        _
    $region32: #{tpu_custom_call.1} parent=5 // pred_fallthru
      _
    %p205 = scmp.le.s32.totalorder 1, %s11
    %p206 = scmp.lt.s32.totalorder %s11, 5
    %p207 = pnand %p205, %p206
    %p208 = pneg %p207
    // Predicated region
    $region37: #{tpu_custom_call.1} parent=5 // pred_check
      _
    $region38: #{tpu_custom_call.1} parent=5 // pred_check_branch
      %210 = sbr.rel (%p207) target = $region40
    $region39: #{tpu_custom_call.1} parent=5 // pred_region
      %s211 = ssub.s32 %s11, 1
      %s212 = smul.u32 4, %s21
      %p213 = scmp.lt.s32.totalorder %s20, 1
      %s214 = scalar_select %p213, %s20, 1
      %p215 = scmp.lt.s32.totalorder %s212, 7
      %s216 = scalar_select %p215, %s212, 7
      %s217 = smul.addr %s214, 8
      %s218 = sadd.s32 %s216, %s217
      %s219 = smul.addr %s218, 4
      %s220 = scalar_lea.vmem %s0, %s219
      %p221 = pneg %p51
      %p222 = pneg %p48
      %p223 = pneg %p72
      %p224 = pneg %p69
      %p225 = pneg %p93
      %p226 = pneg %p90
      %p227 = pneg %p114
      %p228 = pneg %p111
      %p229 = pneg %p135
      %p230 = pneg %p132
      %p231 = pneg %p161
      %p232 = pneg %p158
      %p233 = scmp.lt.s32.totalorder %s20, 1
      %s234 = scalar_select %p233, %s20, 1
      %s235 = smul.addr %s234, 4
      %s236 = smul.addr %s235, 8
      %s237 = scalar_lea.vmem %s5, %s236
      %s238 = smul.u32 4, %s21
      %p239 = scmp.lt.s32.totalorder %s20, 1
      %s240 = scalar_select %p239, %s20, 1
      %p241 = scmp.lt.s32.totalorder %s238, 7
      %s242 = scalar_select %p241, %s238, 7
      %s243 = smul.addr %s240, 8
      %s244 = sadd.s32 %s242, %s243
      %s245 = smul.addr %s244, 4
      %s246 = scalar_lea.vmem %s0, %s245
      %s247 = smul.u32 4, %s21
      %p248 = scmp.lt.s32.totalorder %s20, 1
      %s249 = scalar_select %p248, %s20, 1
      %s250 = smul.addr %s249, 4
      %s251 = smul.addr %s250, 8
      %s252 = scalar_lea.vmem %s5, %s251
      %p254 = scmp.eq.s32.totalorder %s21, 0
      // Predicated region
      $region41: #{tpu_custom_call.1} parent=39 // pred_check
        %p255 = pneg %p254
      $region42: #{tpu_custom_call.1} parent=39 // pred_check_branch
        %257 = sbr.rel (%p255) target = $region44
      $region43: #{tpu_custom_call.1} parent=39 // pred_region
        %vm258 = vcmask 7168
        %259 = vst.msk [vmem:[%s252] sm:$0xff] %vm258, 0.0
        %260 = vst.msk [vmem:[%s252 + $0x8] sm:$0xff] %vm258, 0.0
        %261 = vst.msk [vmem:[%s252 + $0x10] sm:$0xff] %vm258, 0.0
        %262 = vst.msk [vmem:[%s252 + $0x18] sm:$0xff] %vm258, 0.0
      $region44: #{tpu_custom_call.1} parent=39 // pred_fallthru
        _
      %v263 = vld [vmem:[%s4] sm:$0xff]
      %v264 = vld [vmem:[%s4 + $0x8] sm:$0xff]
      %v265 = vld [vmem:[%s4 + $0x10] sm:$0xff]
      %v266 = vld [vmem:[%s4 + $0x18] sm:$0xff]
      %v267 = vld [vmem:[%s4 + $0x20] sm:$0xff]
      %v268 = vld [vmem:[%s4 + $0x28] sm:$0xff]
      %v269 = vld [vmem:[%s4 + $0x30] sm:$0xff]
      %v270 = vld [vmem:[%s4 + $0x38] sm:$0xff]
      %v271 = vld [vmem:[%s246] sm:$0x77]
      %v272 = vld [vmem:[%s246 + $0x8] sm:$0x77]
      %v273 = vld [vmem:[%s1] sm:$0xf]
      %v274 = vld [vmem:[%s1 + $0x4] sm:$0xf]
      %v275 = vld [vmem:[%s1 + $0x8] sm:$0xf]
      %v276 = vld [vmem:[%s1 + $0xc] sm:$0xf]
      %v277 = vld [vmem:[%s1 + $0x10] sm:$0xf]
      %v278 = vld [vmem:[%s1 + $0x14] sm:$0xf]
      %v279 = vld [vmem:[%s1 + $0x18] sm:$0xf]
      %v280 = vld [vmem:[%s1 + $0x1c] sm:$0xf]
      %v281 = vld [vmem:[%s2] sm:$0xf]
      %v282 = vld [vmem:[%s2 + $0x4] sm:$0xf]
      %v283 = vld [vmem:[%s2 + $0x8] sm:$0xf]
      %v284 = vld [vmem:[%s2 + $0xc] sm:$0xf]
      %v285 = vld [vmem:[%s2 + $0x10] sm:$0xf]
      %v286 = vld [vmem:[%s2 + $0x14] sm:$0xf]
      %v287 = vld [vmem:[%s2 + $0x18] sm:$0xf]
      %v288 = vld [vmem:[%s2 + $0x1c] sm:$0xf]
      %v289 = vld [vmem:[%s3] sm:$0xf]
      %v290 = vld [vmem:[%s3 + $0x4] sm:$0xf]
      %v291 = vld [vmem:[%s3 + $0x8] sm:$0xf]
      %v292 = vld [vmem:[%s3 + $0xc] sm:$0xf]
      %v295 = vcombine.high %v271, %v271
      %v296 = vcombine.high %v272, %v272
      %v299 = vpack.c.bf16 %v271, %v271
      %v300 = vpack.c.bf16 %v295, %v295
      %v301 = vpack.c.bf16 %v272, %v272
      %v302 = vpack.c.bf16 %v296, %v296
      %304 = vset.pattern.permute.xlu0 0
      %305 = vperm.xlu0 %304, %v263
      %v306 = vpop.permute.xlu0 %305
      %309 = vset.pattern.permute.xlu0 0
      %310 = vperm.xlu0 %309, %v264
      %v311 = vpop.permute.xlu0 %310
      %314 = vset.pattern.permute.xlu0 0
      %315 = vperm.xlu0 %314, %v265
      %v316 = vpop.permute.xlu0 %315
      %319 = vset.pattern.permute.xlu0 0
      %320 = vperm.xlu0 %319, %v266
      %v321 = vpop.permute.xlu0 %320
      %324 = vset.pattern.permute.xlu0 0
      %325 = vperm.xlu0 %324, %v267
      %v326 = vpop.permute.xlu0 %325
      %329 = vset.pattern.permute.xlu0 0
      %330 = vperm.xlu0 %329, %v268
      %v331 = vpop.permute.xlu0 %330
      %334 = vset.pattern.permute.xlu0 0
      %335 = vperm.xlu0 %334, %v269
      %v336 = vpop.permute.xlu0 %335
      %339 = vset.pattern.permute.xlu0 0
      %340 = vperm.xlu0 %339, %v270
      %v341 = vpop.permute.xlu0 %340
      %v351 = vunpack.c.l.b16 %v273
      %v352 = vunpack.c.l.b16 %v274
      %v353 = vunpack.c.l.b16 %v275
      %v354 = vunpack.c.l.b16 %v276
      %v355 = vunpack.c.l.b16 %v277
      %v356 = vunpack.c.l.b16 %v278
      %v357 = vunpack.c.l.b16 %v279
      %v358 = vunpack.c.l.b16 %v280
      %v359 = vpack.c.b16 %v352, %v351
      %v360 = vpack.c.b16 %v354, %v353
      %v361 = vpack.c.b16 %v356, %v355
      %v362 = vpack.c.b16 %v358, %v357
      %vm363 = vcmask 23552
      %v365 = vsel %vm363, %v359, 0
      %v368 = vsel %vm363, %v360, 0
      %v371 = vsel %vm363, %v361, 0
      %v374 = vsel %vm363, %v362, 0
      %vm376 = vcmask 1040384
      %vm377 = vcmask 1041408
      %v378 = vsel %vm376, 4294967295, 65535
      %v379 = vsel %vm377, %v378, 0
      %v381 = vand.u32 %v299, %v379
      %v384 = vand.u32 %v300, %v379
      %v387 = vand.u32 %v301, %v379
      %v390 = vand.u32 %v302, %v379
      %392 = vmatprep.subr.bf16.mxu0 %v384
      %393 = vmatpush1.bf16.msra.mxu0 %v381
      %394 = vmatprep.subr.bf16.mxu0 0
      %395 = vmatpush1.bf16.msra.mxu0 0
      %396 = vmatprep.subr.bf16.mxu0 0
      %397 = vmatpush1.bf16.msra.mxu0 0
      %398 = vmatprep.subr.bf16.mxu0 0
      %399 = vmatpush1.bf16.msra.mxu0 0
      %400 = vmatprep.subr.bf16.mxu0 0
      %401 = vmatpush1.bf16.msra.mxu0 0
      %402 = vmatprep.subr.bf16.mxu0 0
      %403 = vmatpush1.bf16.msra.mxu0 0
      %404 = vmatprep.subr.bf16.mxu0 0
      %405 = vmatpush1.bf16.msra.mxu0 0
      %406 = vmatprep.subr.bf16.mxu0 0
      %407 = vmatpush1.bf16.msra.mxu0 0
      %408 = vmatprep.subr.bf16.mxu0 0
      %409 = vmatpush1.bf16.msra.mxu0 0
      %410 = vmatprep.subr.bf16.mxu0 0
      %411 = vmatpush1.bf16.msra.mxu0 0
      %412 = vmatprep.subr.bf16.mxu0 0
      %413 = vmatpush1.bf16.msra.mxu0 0
      %414 = vmatprep.subr.bf16.mxu0 0
      %415 = vmatpush1.bf16.msra.mxu0 0
      %416 = vmatprep.subr.bf16.mxu0 0
      %417 = vmatpush1.bf16.msra.mxu0 0
      %418 = vmatprep.subr.bf16.mxu0 0
      %419 = vmatpush1.bf16.msra.mxu0 0
      %420 = vmatprep.subr.bf16.mxu0 0
      %421 = vmatpush1.bf16.msra.mxu0 0
      %422 = vmatprep.subr.bf16.mxu0 0
      %423 = vmatpush1.bf16.msra.mxu0 0
      %424 = vmatprep.mubr.bf16.mxu0 0
      %425 = vmatmul.mubr.bf16.gmra.mrb[0].mxu0 %v365
      %v426 = vpop.f32.mrb[0].mxu0
      %v427 = vadd.f32 %v306, %v426
      %v428 = vpop.f32.mrb[0].mxu0
      %v429 = vadd.f32 %v306, %v428
      %v430 = vpop.f32.mrb[0].mxu0
      %v431 = vadd.f32 %v311, %v430
      %v432 = vpop.f32.mrb[0].mxu0
      %v433 = vadd.f32 %v311, %v432
      %434 = vmatprep.mubr.bf16.mxu0 0
      %435 = vmatmul.mubr.bf16.gmra.mrb[0].mxu0 %v368
      %v436 = vpop.f32.mrb[0].mxu0
      %v437 = vadd.f32 %v316, %v436
      %v438 = vpop.f32.mrb[0].mxu0
      %v439 = vadd.f32 %v316, %v438
      %v440 = vpop.f32.mrb[0].mxu0
      %v441 = vadd.f32 %v321, %v440
      %v442 = vpop.f32.mrb[0].mxu0
      %v443 = vadd.f32 %v321, %v442
      %444 = vmatprep.mubr.bf16.mxu0 0
      %445 = vmatmul.mubr.bf16.gmra.mrb[0].mxu0 %v371
      %v446 = vpop.f32.mrb[0].mxu0
      %v447 = vadd.f32 %v326, %v446
      %v448 = vpop.f32.mrb[0].mxu0
      %v449 = vadd.f32 %v326, %v448
      %v450 = vpop.f32.mrb[0].mxu0
      %v451 = vadd.f32 %v331, %v450
      %v452 = vpop.f32.mrb[0].mxu0
      %v453 = vadd.f32 %v331, %v452
      %454 = vmatprep.mubr.bf16.mxu0 0
      %455 = vmatmul.mubr.bf16.gmra.mrb[0].mxu0 %v374
      %v456 = vpop.f32.mrb[0].mxu0
      %v457 = vadd.f32 %v336, %v456
      %v458 = vpop.f32.mrb[0].mxu0
      %v459 = vadd.f32 %v336, %v458
      %v460 = vpop.f32.mrb[0].mxu0
      %v461 = vadd.f32 %v341, %v460
      %v462 = vpop.f32.mrb[0].mxu0
      %v463 = vadd.f32 %v341, %v462
      %464 = vdwg.mxu0
      %465 = vmatprep.subr.bf16.mxu0 %v390
      %466 = vmatpush1.bf16.msra.mxu0 %v387
      %467 = vmatprep.subr.bf16.mxu0 0
      %468 = vmatpush1.bf16.msra.mxu0 0
      %469 = vmatprep.subr.bf16.mxu0 0
      %470 = vmatpush1.bf16.msra.mxu0 0
      %471 = vmatprep.subr.bf16.mxu0 0
      %472 = vmatpush1.bf16.msra.mxu0 0
      %473 = vmatprep.subr.bf16.mxu0 0
      %474 = vmatpush1.bf16.msra.mxu0 0
      %475 = vmatprep.subr.bf16.mxu0 0
      %476 = vmatpush1.bf16.msra.mxu0 0
      %477 = vmatprep.subr.bf16.mxu0 0
      %478 = vmatpush1.bf16.msra.mxu0 0
      %479 = vmatprep.subr.bf16.mxu0 0
      %480 = vmatpush1.bf16.msra.mxu0 0
      %481 = vmatprep.subr.bf16.mxu0 0
      %482 = vmatpush1.bf16.msra.mxu0 0
      %483 = vmatprep.subr.bf16.mxu0 0
      %484 = vmatpush1.bf16.msra.mxu0 0
      %485 = vmatprep.subr.bf16.mxu0 0
      %486 = vmatpush1.bf16.msra.mxu0 0
      %487 = vmatprep.subr.bf16.mxu0 0
      %488 = vmatpush1.bf16.msra.mxu0 0
      %489 = vmatprep.subr.bf16.mxu0 0
      %490 = vmatpush1.bf16.msra.mxu0 0
      %491 = vmatprep.subr.bf16.mxu0 0
      %492 = vmatpush1.bf16.msra.mxu0 0
      %493 = vmatprep.subr.bf16.mxu0 0
      %494 = vmatpush1.bf16.msra.mxu0 0
      %495 = vmatprep.subr.bf16.mxu0 0
      %496 = vmatpush1.bf16.msra.mxu0 0
      %497 = vmatprep.mubr.bf16.mxu0 0
      %498 = vmatmul.mubr.bf16.gmra.mrb[0].mxu0 %v365
      %v499 = vpop.f32.mrb[0].mxu0
      %v500 = vadd.f32 %v306, %v499
      %v501 = vpop.f32.mrb[0].mxu0
      %v502 = vadd.f32 %v306, %v501
      %v503 = vpop.f32.mrb[0].mxu0
      %v504 = vadd.f32 %v311, %v503
      %v505 = vpop.f32.mrb[0].mxu0
      %v506 = vadd.f32 %v311, %v505
      %507 = vmatprep.mubr.bf16.mxu0 0
      %508 = vmatmul.mubr.bf16.gmra.mrb[0].mxu0 %v368
      %v509 = vpop.f32.mrb[0].mxu0
      %v510 = vadd.f32 %v316, %v509
      %v511 = vpop.f32.mrb[0].mxu0
      %v512 = vadd.f32 %v316, %v511
      %v513 = vpop.f32.mrb[0].mxu0
      %v514 = vadd.f32 %v321, %v513
      %v515 = vpop.f32.mrb[0].mxu0
      %v516 = vadd.f32 %v321, %v515
      %517 = vmatprep.mubr.bf16.mxu0 0
      %518 = vmatmul.mubr.bf16.gmra.mrb[0].mxu0 %v371
      %v519 = vpop.f32.mrb[0].mxu0
      %v520 = vadd.f32 %v326, %v519
      %v521 = vpop.f32.mrb[0].mxu0
      %v522 = vadd.f32 %v326, %v521
      %v523 = vpop.f32.mrb[0].mxu0
      %v524 = vadd.f32 %v331, %v523
      %v525 = vpop.f32.mrb[0].mxu0
      %v526 = vadd.f32 %v331, %v525
      %527 = vmatprep.mubr.bf16.mxu0 0
      %528 = vmatmul.mubr.bf16.gmra.mrb[0].mxu0 %v374
      %v529 = vpop.f32.mrb[0].mxu0
      %v530 = vadd.f32 %v336, %v529
      %v531 = vpop.f32.mrb[0].mxu0
      %v532 = vadd.f32 %v336, %v531
      %v533 = vpop.f32.mrb[0].mxu0
      %v534 = vadd.f32 %v341, %v533
      %v535 = vpop.f32.mrb[0].mxu0
      %v536 = vadd.f32 %v341, %v535
      %537 = vdwg.mxu0
      %v538 = vmax.f32 %v427, 0.0
      %v539 = vmax.f32 %v429, 0.0
      %v540 = vmax.f32 %v500, 0.0
      %v541 = vmax.f32 %v502, 0.0
      %v542 = vmax.f32 %v431, 0.0
      %v543 = vmax.f32 %v433, 0.0
      %v544 = vmax.f32 %v504, 0.0
      %v545 = vmax.f32 %v506, 0.0
      %v546 = vmax.f32 %v437, 0.0
      %v547 = vmax.f32 %v439, 0.0
      %v548 = vmax.f32 %v510, 0.0
      %v549 = vmax.f32 %v512, 0.0
      %v550 = vmax.f32 %v441, 0.0
      %v551 = vmax.f32 %v443, 0.0
      %v552 = vmax.f32 %v514, 0.0
      %v553 = vmax.f32 %v516, 0.0
      %v554 = vmax.f32 %v447, 0.0
      %v555 = vmax.f32 %v449, 0.0
      %v556 = vmax.f32 %v520, 0.0
      %v557 = vmax.f32 %v522, 0.0
      %v558 = vmax.f32 %v451, 0.0
      %v559 = vmax.f32 %v453, 0.0
      %v560 = vmax.f32 %v524, 0.0
      %v561 = vmax.f32 %v526, 0.0
      %v562 = vmax.f32 %v457, 0.0
      %v563 = vmax.f32 %v459, 0.0
      %v564 = vmax.f32 %v530, 0.0
      %v565 = vmax.f32 %v532, 0.0
      %v566 = vmax.f32 %v461, 0.0
      %v567 = vmax.f32 %v463, 0.0
      %v568 = vmax.f32 %v534, 0.0
      %v569 = vmax.f32 %v536, 0.0
      %v570 = vpack.c.bf16 %v542, %v538
      %v571 = vpack.c.bf16 %v543, %v539
      %v572 = vpack.c.bf16 %v544, %v540
      %v573 = vpack.c.bf16 %v545, %v541
      %v574 = vpack.c.bf16 %v550, %v546
      %v575 = vpack.c.bf16 %v551, %v547
      %v576 = vpack.c.bf16 %v552, %v548
      %v577 = vpack.c.bf16 %v553, %v549
      %v578 = vpack.c.bf16 %v558, %v554
      %v579 = vpack.c.bf16 %v559, %v555
      %v580 = vpack.c.bf16 %v560, %v556
      %v581 = vpack.c.bf16 %v561, %v557
      %v582 = vpack.c.bf16 %v566, %v562
      %v583 = vpack.c.bf16 %v567, %v563
      %v584 = vpack.c.bf16 %v568, %v564
      %v585 = vpack.c.bf16 %v569, %v565
      %586 = vset.pattern.permute.xlu0 1
      %587 = vperm.xlu0 %586, %v263
      %v588 = vpop.permute.xlu0 %587
      %590 = vset.pattern.permute.xlu0 1
      %591 = vperm.xlu0 %590, %v264
      %v592 = vpop.permute.xlu0 %591
      %594 = vset.pattern.permute.xlu0 1
      %595 = vperm.xlu0 %594, %v265
      %v596 = vpop.permute.xlu0 %595
      %598 = vset.pattern.permute.xlu0 1
      %599 = vperm.xlu0 %598, %v266
      %v600 = vpop.permute.xlu0 %599
      %602 = vset.pattern.permute.xlu0 1
      %603 = vperm.xlu0 %602, %v267
      %v604 = vpop.permute.xlu0 %603
      %606 = vset.pattern.permute.xlu0 1
      %607 = vperm.xlu0 %606, %v268
      %v608 = vpop.permute.xlu0 %607
      %610 = vset.pattern.permute.xlu0 1
      %611 = vperm.xlu0 %610, %v269
      %v612 = vpop.permute.xlu0 %611
      %614 = vset.pattern.permute.xlu0 1
      %615 = vperm.xlu0 %614, %v270
      %v616 = vpop.permute.xlu0 %615
      %v626 = vunpack.c.l.b16 %v281
      %v627 = vunpack.c.l.b16 %v282
      %v628 = vunpack.c.l.b16 %v283
      %v629 = vunpack.c.l.b16 %v284
      %v630 = vunpack.c.l.b16 %v285
      %v631 = vunpack.c.l.b16 %v286
      %v632 = vunpack.c.l.b16 %v287
      %v633 = vunpack.c.l.b16 %v288
      %v634 = vpack.c.b16 %v627, %v626
      %v635 = vpack.c.b16 %v629, %v628
      %v636 = vpack.c.b16 %v631, %v630
      %v637 = vpack.c.b16 %v633, %v632
      %vm638 = vcmask 523264
      %v640 = vsel %vm638, %v634, 0
      %v643 = vsel %vm638, %v635, 0
      %v646 = vsel %vm638, %v636, 0
      %v649 = vsel %vm638, %v637, 0
      %651 = vmatprep.subr.bf16.mxu0 %v571
      %652 = vmatpush1.bf16.msra.mxu0 %v570
      %653 = vmatprep.subr.bf16.mxu0 %v575
      %654 = vmatpush1.bf16.msra.mxu0 %v574
      %655 = vmatprep.subr.bf16.mxu0 %v579
      %656 = vmatpush1.bf16.msra.mxu0 %v578
      %657 = vmatprep.subr.bf16.mxu0 %v583
      %658 = vmatpush1.bf16.msra.mxu0 %v582
      %659 = vmatprep.subr.bf16.mxu0 0
      %660 = vmatpush1.bf16.msra.mxu0 0
      %661 = vmatprep.subr.bf16.mxu0 0
      %662 = vmatpush1.bf16.msra.mxu0 0
      %663 = vmatprep.subr.bf16.mxu0 0
      %664 = vmatpush1.bf16.msra.mxu0 0
      %665 = vmatprep.subr.bf16.mxu0 0
      %666 = vmatpush1.bf16.msra.mxu0 0
      %667 = vmatprep.subr.bf16.mxu0 0
      %668 = vmatpush1.bf16.msra.mxu0 0
      %669 = vmatprep.subr.bf16.mxu0 0
      %670 = vmatpush1.bf16.msra.mxu0 0
      %671 = vmatprep.subr.bf16.mxu0 0
      %672 = vmatpush1.bf16.msra.mxu0 0
      %673 = vmatprep.subr.bf16.mxu0 0
      %674 = vmatpush1.bf16.msra.mxu0 0
      %675 = vmatprep.subr.bf16.mxu0 0
      %676 = vmatpush1.bf16.msra.mxu0 0
      %677 = vmatprep.subr.bf16.mxu0 0
      %678 = vmatpush1.bf16.msra.mxu0 0
      %679 = vmatprep.subr.bf16.mxu0 0
      %680 = vmatpush1.bf16.msra.mxu0 0
      %681 = vmatprep.subr.bf16.mxu0 0
      %682 = vmatpush1.bf16.msra.mxu0 0
      %683 = vmatprep.mubr.bf16.mxu0 0
      %684 = vmatmul.mubr.bf16.gmra.mrb[0].mxu0 %v640
      %v685 = vpop.f32.mrb[0].mxu0
      %v686 = vadd.f32 %v588, %v685
      %v687 = vpop.f32.mrb[0].mxu0
      %v688 = vadd.f32 %v588, %v687
      %v689 = vpop.f32.mrb[0].mxu0
      %v690 = vadd.f32 %v592, %v689
      %v691 = vpop.f32.mrb[0].mxu0
      %v692 = vadd.f32 %v592, %v691
      %693 = vmatprep.mubr.bf16.mxu0 0
      %694 = vmatmul.mubr.bf16.gmra.mrb[0].mxu0 %v643
      %v695 = vpop.f32.mrb[0].mxu0
      %v696 = vadd.f32 %v596, %v695
      %v697 = vpop.f32.mrb[0].mxu0
      %v698 = vadd.f32 %v596, %v697
      %v699 = vpop.f32.mrb[0].mxu0
      %v700 = vadd.f32 %v600, %v699
      %v701 = vpop.f32.mrb[0].mxu0
      %v702 = vadd.f32 %v600, %v701
      %703 = vmatprep.mubr.bf16.mxu0 0
      %704 = vmatmul.mubr.bf16.gmra.mrb[0].mxu0 %v646
      %v705 = vpop.f32.mrb[0].mxu0
      %v706 = vadd.f32 %v604, %v705
      %v707 = vpop.f32.mrb[0].mxu0
      %v708 = vadd.f32 %v604, %v707
      %v709 = vpop.f32.mrb[0].mxu0
      %v710 = vadd.f32 %v608, %v709
      %v711 = vpop.f32.mrb[0].mxu0
      %v712 = vadd.f32 %v608, %v711
      %713 = vmatprep.mubr.bf16.mxu0 0
      %714 = vmatmul.mubr.bf16.gmra.mrb[0].mxu0 %v649
      %v715 = vpop.f32.mrb[0].mxu0
      %v716 = vadd.f32 %v612, %v715
      %v717 = vpop.f32.mrb[0].mxu0
      %v718 = vadd.f32 %v612, %v717
      %v719 = vpop.f32.mrb[0].mxu0
      %v720 = vadd.f32 %v616, %v719
      %v721 = vpop.f32.mrb[0].mxu0
      %v722 = vadd.f32 %v616, %v721
      %723 = vdwg.mxu0
      %724 = vmatprep.subr.bf16.mxu0 %v573
      %725 = vmatpush1.bf16.msra.mxu0 %v572
      %726 = vmatprep.subr.bf16.mxu0 %v577
      %727 = vmatpush1.bf16.msra.mxu0 %v576
      %728 = vmatprep.subr.bf16.mxu0 %v581
      %729 = vmatpush1.bf16.msra.mxu0 %v580
      %730 = vmatprep.subr.bf16.mxu0 %v585
      %731 = vmatpush1.bf16.msra.mxu0 %v584
      %732 = vmatprep.subr.bf16.mxu0 0
      %733 = vmatpush1.bf16.msra.mxu0 0
      %734 = vmatprep.subr.bf16.mxu0 0
      %735 = vmatpush1.bf16.msra.mxu0 0
      %736 = vmatprep.subr.bf16.mxu0 0
      %737 = vmatpush1.bf16.msra.mxu0 0
      %738 = vmatprep.subr.bf16.mxu0 0
      %739 = vmatpush1.bf16.msra.mxu0 0
      %740 = vmatprep.subr.bf16.mxu0 0
      %741 = vmatpush1.bf16.msra.mxu0 0
      %742 = vmatprep.subr.bf16.mxu0 0
      %743 = vmatpush1.bf16.msra.mxu0 0
      %744 = vmatprep.subr.bf16.mxu0 0
      %745 = vmatpush1.bf16.msra.mxu0 0
      %746 = vmatprep.subr.bf16.mxu0 0
      %747 = vmatpush1.bf16.msra.mxu0 0
      %748 = vmatprep.subr.bf16.mxu0 0
      %749 = vmatpush1.bf16.msra.mxu0 0
      %750 = vmatprep.subr.bf16.mxu0 0
      %751 = vmatpush1.bf16.msra.mxu0 0
      %752 = vmatprep.subr.bf16.mxu0 0
      %753 = vmatpush1.bf16.msra.mxu0 0
      %754 = vmatprep.subr.bf16.mxu0 0
      %755 = vmatpush1.bf16.msra.mxu0 0
      %756 = vmatprep.mubr.bf16.mxu0 0
      %757 = vmatmul.mubr.bf16.gmra.mrb[0].mxu0 %v640
      %v758 = vpop.f32.mrb[0].mxu0
      %v759 = vadd.f32 %v588, %v758
      %v760 = vpop.f32.mrb[0].mxu0
      %v761 = vadd.f32 %v588, %v760
      %v762 = vpop.f32.mrb[0].mxu0
      %v763 = vadd.f32 %v592, %v762
      %v764 = vpop.f32.mrb[0].mxu0
      %v765 = vadd.f32 %v592, %v764
      %766 = vmatprep.mubr.bf16.mxu0 0
      %767 = vmatmul.mubr.bf16.gmra.mrb[0].mxu0 %v643
      %v768 = vpop.f32.mrb[0].mxu0
      %v769 = vadd.f32 %v596, %v768
      %v770 = vpop.f32.mrb[0].mxu0
      %v771 = vadd.f32 %v596, %v770
      %v772 = vpop.f32.mrb[0].mxu0
      %v773 = vadd.f32 %v600, %v772
      %v774 = vpop.f32.mrb[0].mxu0
      %v775 = vadd.f32 %v600, %v774
      %776 = vmatprep.mubr.bf16.mxu0 0
      %777 = vmatmul.mubr.bf16.gmra.mrb[0].mxu0 %v646
      %v778 = vpop.f32.mrb[0].mxu0
      %v779 = vadd.f32 %v604, %v778
      %v780 = vpop.f32.mrb[0].mxu0
      %v781 = vadd.f32 %v604, %v780
      %v782 = vpop.f32.mrb[0].mxu0
      %v783 = vadd.f32 %v608, %v782
      %v784 = vpop.f32.mrb[0].mxu0
      %v785 = vadd.f32 %v608, %v784
      %786 = vmatprep.mubr.bf16.mxu0 0
      %787 = vmatmul.mubr.bf16.gmra.mrb[0].mxu0 %v649
      %v788 = vpop.f32.mrb[0].mxu0
      %v789 = vadd.f32 %v612, %v788
      %v790 = vpop.f32.mrb[0].mxu0
      %v791 = vadd.f32 %v612, %v790
      %v792 = vpop.f32.mrb[0].mxu0
      %v793 = vadd.f32 %v616, %v792
      %v794 = vpop.f32.mrb[0].mxu0
      %v795 = vadd.f32 %v616, %v794
      %796 = vdwg.mxu0
      %v797 = vmax.f32 %v686, 0.0
      %v798 = vmax.f32 %v688, 0.0
      %v799 = vmax.f32 %v759, 0.0
      %v800 = vmax.f32 %v761, 0.0
      %v801 = vmax.f32 %v690, 0.0
      %v802 = vmax.f32 %v692, 0.0
      %v803 = vmax.f32 %v763, 0.0
      %v804 = vmax.f32 %v765, 0.0
      %v805 = vmax.f32 %v696, 0.0
      %v806 = vmax.f32 %v698, 0.0
      %v807 = vmax.f32 %v769, 0.0
      %v808 = vmax.f32 %v771, 0.0
      %v809 = vmax.f32 %v700, 0.0
      %v810 = vmax.f32 %v702, 0.0
      %v811 = vmax.f32 %v773, 0.0
      %v812 = vmax.f32 %v775, 0.0
      %v813 = vmax.f32 %v706, 0.0
      %v814 = vmax.f32 %v708, 0.0
      %v815 = vmax.f32 %v779, 0.0
      %v816 = vmax.f32 %v781, 0.0
      %v817 = vmax.f32 %v710, 0.0
      %v818 = vmax.f32 %v712, 0.0
      %v819 = vmax.f32 %v783, 0.0
      %v820 = vmax.f32 %v785, 0.0
      %v821 = vmax.f32 %v716, 0.0
      %v822 = vmax.f32 %v718, 0.0
      %v823 = vmax.f32 %v789, 0.0
      %v824 = vmax.f32 %v791, 0.0
      %v825 = vmax.f32 %v720, 0.0
      %v826 = vmax.f32 %v722, 0.0
      %v827 = vmax.f32 %v793, 0.0
      %v828 = vmax.f32 %v795, 0.0
      %v829 = vpack.c.bf16 %v801, %v797
      %v830 = vpack.c.bf16 %v802, %v798
      %v831 = vpack.c.bf16 %v803, %v799
      %v832 = vpack.c.bf16 %v804, %v800
      %v833 = vpack.c.bf16 %v809, %v805
      %v834 = vpack.c.bf16 %v810, %v806
      %v835 = vpack.c.bf16 %v811, %v807
      %v836 = vpack.c.bf16 %v812, %v808
      %v837 = vpack.c.bf16 %v817, %v813
      %v838 = vpack.c.bf16 %v818, %v814
      %v839 = vpack.c.bf16 %v819, %v815
      %v840 = vpack.c.bf16 %v820, %v816
      %v841 = vpack.c.bf16 %v825, %v821
      %v842 = vpack.c.bf16 %v826, %v822
      %v843 = vpack.c.bf16 %v827, %v823
      %v844 = vpack.c.bf16 %v828, %v824
      %845 = vset.pattern.permute.xlu0 2
      %846 = vperm.xlu0 %845, %v263
      %v847 = vpop.permute.xlu0 %846
      %849 = vset.pattern.permute.xlu0 2
      %850 = vperm.xlu0 %849, %v264
      %v851 = vpop.permute.xlu0 %850
      %853 = vset.pattern.permute.xlu0 2
      %854 = vperm.xlu0 %853, %v265
      %v855 = vpop.permute.xlu0 %854
      %857 = vset.pattern.permute.xlu0 2
      %858 = vperm.xlu0 %857, %v266
      %v859 = vpop.permute.xlu0 %858
      %v865 = vunpack.c.l.b16 %v289
      %v866 = vunpack.c.l.b16 %v290
      %v867 = vunpack.c.l.b16 %v291
      %v868 = vunpack.c.l.b16 %v292
      %v869 = vpack.c.b16 %v866, %v865
      %v870 = vpack.c.b16 %v868, %v867
      %v872 = vsel %vm638, %v869, 0
      %v875 = vsel %vm638, %v870, 0
      %877 = vmatprep.subr.bf16.mxu0 %v830
      %878 = vmatpush1.bf16.msra.mxu0 %v829
      %879 = vmatprep.subr.bf16.mxu0 %v834
      %880 = vmatpush1.bf16.msra.mxu0 %v833
      %881 = vmatprep.subr.bf16.mxu0 %v838
      %882 = vmatpush1.bf16.msra.mxu0 %v837
      %883 = vmatprep.subr.bf16.mxu0 %v842
      %884 = vmatpush1.bf16.msra.mxu0 %v841
      %885 = vmatprep.subr.bf16.mxu0 0
      %886 = vmatpush1.bf16.msra.mxu0 0
      %887 = vmatprep.subr.bf16.mxu0 0
      %888 = vmatpush1.bf16.msra.mxu0 0
      %889 = vmatprep.subr.bf16.mxu0 0
      %890 = vmatpush1.bf16.msra.mxu0 0
      %891 = vmatprep.subr.bf16.mxu0 0
      %892 = vmatpush1.bf16.msra.mxu0 0
      %893 = vmatprep.subr.bf16.mxu0 0
      %894 = vmatpush1.bf16.msra.mxu0 0
      %895 = vmatprep.subr.bf16.mxu0 0
      %896 = vmatpush1.bf16.msra.mxu0 0
      %897 = vmatprep.subr.bf16.mxu0 0
      %898 = vmatpush1.bf16.msra.mxu0 0
      %899 = vmatprep.subr.bf16.mxu0 0
      %900 = vmatpush1.bf16.msra.mxu0 0
      %901 = vmatprep.subr.bf16.mxu0 0
      %902 = vmatpush1.bf16.msra.mxu0 0
      %903 = vmatprep.subr.bf16.mxu0 0
      %904 = vmatpush1.bf16.msra.mxu0 0
      %905 = vmatprep.subr.bf16.mxu0 0
      %906 = vmatpush1.bf16.msra.mxu0 0
      %907 = vmatprep.subr.bf16.mxu0 0
      %908 = vmatpush1.bf16.msra.mxu0 0
      %909 = vmatprep.mubr.bf16.mxu0 0
      %910 = vmatmul.mubr.bf16.gmra.mrb[0].mxu0 %v872
      %v911 = vpop.f32.mrb[0].mxu0
      %v912 = vadd.f32 %v847, %v911
      %v913 = vpop.f32.mrb[0].mxu0
      %v914 = vadd.f32 %v847, %v913
      %v915 = vpop.f32.mrb[0].mxu0
      %v916 = vadd.f32 %v851, %v915
      %v917 = vpop.f32.mrb[0].mxu0
      %v918 = vadd.f32 %v851, %v917
      %919 = vmatprep.mubr.bf16.mxu0 0
      %920 = vmatmul.mubr.bf16.gmra.mrb[0].mxu0 %v875
      %v921 = vpop.f32.mrb[0].mxu0
      %v922 = vadd.f32 %v855, %v921
      %v923 = vpop.f32.mrb[0].mxu0
      %v924 = vadd.f32 %v855, %v923
      %v925 = vpop.f32.mrb[0].mxu0
      %v926 = vadd.f32 %v859, %v925
      %v927 = vpop.f32.mrb[0].mxu0
      %v928 = vadd.f32 %v859, %v927
      %929 = vdwg.mxu0
      %930 = vmatprep.subr.bf16.mxu0 %v832
      %931 = vmatpush1.bf16.msra.mxu0 %v831
      %932 = vmatprep.subr.bf16.mxu0 %v836
      %933 = vmatpush1.bf16.msra.mxu0 %v835
      %934 = vmatprep.subr.bf16.mxu0 %v840
      %935 = vmatpush1.bf16.msra.mxu0 %v839
      %936 = vmatprep.subr.bf16.mxu0 %v844
      %937 = vmatpush1.bf16.msra.mxu0 %v843
      %938 = vmatprep.subr.bf16.mxu0 0
      %939 = vmatpush1.bf16.msra.mxu0 0
      %940 = vmatprep.subr.bf16.mxu0 0
      %941 = vmatpush1.bf16.msra.mxu0 0
      %942 = vmatprep.subr.bf16.mxu0 0
      %943 = vmatpush1.bf16.msra.mxu0 0
      %944 = vmatprep.subr.bf16.mxu0 0
      %945 = vmatpush1.bf16.msra.mxu0 0
      %946 = vmatprep.subr.bf16.mxu0 0
      %947 = vmatpush1.bf16.msra.mxu0 0
      %948 = vmatprep.subr.bf16.mxu0 0
      %949 = vmatpush1.bf16.msra.mxu0 0
      %950 = vmatprep.subr.bf16.mxu0 0
      %951 = vmatpush1.bf16.msra.mxu0 0
      %952 = vmatprep.subr.bf16.mxu0 0
      %953 = vmatpush1.bf16.msra.mxu0 0
      %954 = vmatprep.subr.bf16.mxu0 0
      %955 = vmatpush1.bf16.msra.mxu0 0
      %956 = vmatprep.subr.bf16.mxu0 0
      %957 = vmatpush1.bf16.msra.mxu0 0
      %958 = vmatprep.subr.bf16.mxu0 0
      %959 = vmatpush1.bf16.msra.mxu0 0
      %960 = vmatprep.subr.bf16.mxu0 0
      %961 = vmatpush1.bf16.msra.mxu0 0
      %962 = vmatprep.mubr.bf16.mxu0 0
      %963 = vmatmul.mubr.bf16.gmra.mrb[0].mxu0 %v872
      %v964 = vpop.f32.mrb[0].mxu0
      %v965 = vadd.f32 %v847, %v964
      %v966 = vpop.f32.mrb[0].mxu0
      %v967 = vadd.f32 %v847, %v966
      %v968 = vpop.f32.mrb[0].mxu0
      %v969 = vadd.f32 %v851, %v968
      %v970 = vpop.f32.mrb[0].mxu0
      %v971 = vadd.f32 %v851, %v970
      %972 = vmatprep.mubr.bf16.mxu0 0
      %973 = vmatmul.mubr.bf16.gmra.mrb[0].mxu0 %v875
      %v974 = vpop.f32.mrb[0].mxu0
      %v975 = vadd.f32 %v855, %v974
      %v976 = vpop.f32.mrb[0].mxu0
      %v977 = vadd.f32 %v855, %v976
      %v978 = vpop.f32.mrb[0].mxu0
      %v979 = vadd.f32 %v859, %v978
      %v980 = vpop.f32.mrb[0].mxu0
      %v981 = vadd.f32 %v859, %v980
      %982 = vdwg.mxu0
      %v983 = vmax.f32 %v912, 0.0
      %v984 = vmax.f32 %v914, 0.0
      %v985 = vmax.f32 %v965, 0.0
      %v986 = vmax.f32 %v967, 0.0
      %v987 = vmax.f32 %v916, 0.0
      %v988 = vmax.f32 %v918, 0.0
      %v989 = vmax.f32 %v969, 0.0
      %v990 = vmax.f32 %v971, 0.0
      %v991 = vmax.f32 %v922, 0.0
      %v992 = vmax.f32 %v924, 0.0
      %v993 = vmax.f32 %v975, 0.0
      %v994 = vmax.f32 %v977, 0.0
      %v995 = vmax.f32 %v926, 0.0
      %v996 = vmax.f32 %v928, 0.0
      %v997 = vmax.f32 %v979, 0.0
      %v998 = vmax.f32 %v981, 0.0
      %v999 = vld [vmem:[%s252] sm:$0xff]
      %v1000 = vld [vmem:[%s252 + $0x8] sm:$0xff]
      %v1001 = vld [vmem:[%s252 + $0x10] sm:$0xff]
      %v1002 = vld [vmem:[%s252 + $0x18] sm:$0xff]
      %v1003 = vadd.f32 %v983, %v984
      %v1004 = vadd.f32 %v1003, %v985
      %v1005 = vadd.f32 %v1004, %v986
      %1006 = vadd.xlane.f32.xlu0 %v1005
      %v1007 = vpop.xlane.xlu0 %1006
      %v1008 = vadd.f32 %v987, %v988
      %v1009 = vadd.f32 %v1008, %v989
      %v1010 = vadd.f32 %v1009, %v990
      %1011 = vadd.xlane.f32.xlu0 %v1010
      %v1012 = vpop.xlane.xlu0 %1011
      %v1013 = vadd.f32 %v991, %v992
      %v1014 = vadd.f32 %v1013, %v993
      %v1015 = vadd.f32 %v1014, %v994
      %1016 = vadd.xlane.f32.xlu0 %v1015
      %v1017 = vpop.xlane.xlu0 %1016
      %v1018 = vadd.f32 %v995, %v996
      %v1019 = vadd.f32 %v1018, %v997
      %v1020 = vadd.f32 %v1019, %v998
      %1021 = vadd.xlane.f32.xlu0 %v1020
      %v1022 = vpop.xlane.xlu0 %1021
      %v1023 = vadd.f32 %v999, %v1007
      %v1024 = vadd.f32 %v1000, %v1012
      %v1025 = vadd.f32 %v1001, %v1017
      %v1026 = vadd.f32 %v1002, %v1022
      %vm1027 = vcmask 7168
      %1028 = vst.msk [vmem:[%s252] sm:$0xff] %vm1027, %v1023
      %1029 = vst.msk [vmem:[%s252 + $0x8] sm:$0xff] %vm1027, %v1024
      %1030 = vst.msk [vmem:[%s252 + $0x10] sm:$0xff] %vm1027, %v1025
      %1031 = vst.msk [vmem:[%s252 + $0x18] sm:$0xff] %vm1027, %v1026
      %p1032 = scmp.lt.s32.totalorder %s20, 1
      %s1033 = scalar_select %p1032, %s20, 1
      %s1034 = smul.addr %s1033, 4
      %s1035 = smul.addr %s1034, 8
      %s1036 = scalar_lea.vmem %s5, %s1035
      // Predicated region
      $region45: #{tpu_custom_call.1} parent=39 // pred_check
        %p1037 = pneg %p158
      $region46: #{tpu_custom_call.1} parent=39 // pred_check_branch
        %1039 = sbr.rel (%p1037) target = $region48
      $region47: #{tpu_custom_call.1} parent=39 // pred_region
        _
      $region48: #{tpu_custom_call.1} parent=39 // pred_fallthru
        _
    $region40: #{tpu_custom_call.1} parent=5 // pred_fallthru
      _
    %p1040 = scmp.le.s32.totalorder 2, %s11
    // Predicated region
    $region49: #{tpu_custom_call.1} parent=5 // pred_check
      %p1041 = pneg %p1040
    $region50: #{tpu_custom_call.1} parent=5 // pred_check_branch
      %1043 = sbr.rel (%p1041) target = $region52
    $region51: #{tpu_custom_call.1} parent=5 // pred_region
      %s1044 = ssub.s32 %s11, 2
      // Predicated region
      $region53: #{tpu_custom_call.1} parent=51 // pred_check
        %p1045 = pneg %p164
      $region54: #{tpu_custom_call.1} parent=51 // pred_check_branch
        %1047 = sbr.rel (%p1045) target = $region56
      $region55: #{tpu_custom_call.1} parent=51 // pred_region
        %p1048 = scmp.lt.s32.totalorder %s22, 1
        %s1049 = scalar_select %p1048, %s22, 1
        %s1050 = smul.addr %s1049, 4
        %s1051 = smul.addr %s1050, 8
        %s1052 = scalar_lea.vmem %s5, %s1051
      $region56: #{tpu_custom_call.1} parent=51 // pred_fallthru
        _
    $region52: #{tpu_custom_call.1} parent=5 // pred_fallthru
      _
  $region6: #{tpu_custom_call.1} parent=0 // loop_footer
    %s15 = sadd.s32 1, %s11
  $region7: #{tpu_custom_call.1} parent=0 // loop_footer_branch
    %10 = sbr.rel target = $region3
  $region8: #{tpu_custom_call.1} parent=0 // loop_exit
    _

</llo_original>
